<compile_context>
chip_gen: v7x
topology: tpu7x:2x2x1
jax: 0.10.0
libtpu: 0.0.40
codegen_flags: <defaults>
</compile_context>

<pallas_src>
import functools

import jax
import jax.numpy as jnp
from jax import lax
from jax.experimental import pallas as pl
from jax.experimental.pallas import tpu as pltpu

_SUBLANE = 8      # f32 sublane count
_HALF_LANE = 64   # pad real/imag feature widths so [re|im] width % 128 == 0


def _round_up(x, m):
    return ((x + m - 1) // m) * m


def _vmem_capacity_bytes():
    """Per-core VMEM capacity; falls back to the smallest (v7x's 64 MiB)."""
    try:
        info = pltpu.get_tpu_info()
        for attr in ("vmem_capacity_bytes", "vmem_bytes", "vmem_size_bytes"):
            cap = getattr(info, attr, None)
            if cap:
                return int(cap)
    except Exception:
        pass
    return 64 << 20


def _layer_vmem_bytes(t_block, b_tile, two_i, two_h, io_bytes, w_bytes):
    """Conservative per-layer VMEM need for one grid step (incl. zx)."""
    f32b = 4
    rows = t_block * b_tile
    return (2 * rows * two_i * io_bytes            # x block (double-buffered)
            + 2 * rows * two_h * io_bytes          # y block (double-buffered)
            + (two_i + two_h) * two_h * w_bytes    # resident Wx + Wh (single-buffered)
            + 2 * b_tile * two_h * f32b            # h0 (double-buffered)
            + two_h * f32b                         # bias
            + b_tile * two_h * f32b                # hidden-state scratch
            + rows * two_h * f32b                  # zx scratch
            + rows * two_h * f32b)                 # live zx matmul result (headroom)


# ----------------------------------------------------------------------------
# Pallas kernel: one cRNNCell layer over a block of timesteps per grid step.
# Grid = (batch_tiles ["parallel"], time_blocks ["arbitrary"]).
# Hidden state carried across the time-block axis in VMEM scratch.
# ----------------------------------------------------------------------------
def crnn_layer_kernel(x_ref, h0_ref, wx_ref, wh_ref, b_ref, y_ref, h_s, zx_s,
                      *, t_block, b_tile, matmul_dtype, unroll):
    tb = pl.program_id(1)

    @pl.when(tb == 0)
    def _():
        # New batch tile / start of sequence: load the initial hidden state.
        h_s[...] = h0_ref[...].astype(jnp.float32)

    f32 = jnp.float32

    # Hoisted input projection + bias: ONE fat MXU matmul for the whole time
    # block.  x is packed [xr | xi]; wx is [[Wr, Wi], [-Wi, Wr]] (already in
    # matmul_dtype from the wrapper), so the result is the packed complex
    # product [Re(xWx) | Im(xWx)].  Result goes to a VMEM scratch so the
    # timestep loop below can index it dynamically without keeping a fat value
    # live in vregs.
    x = x_ref[...].astype(matmul_dtype)
    zx_s[...] = jnp.dot(x, wx_ref[...], preferred_element_type=f32) + b_ref[...]

    wh = wh_ref[...]   # grid-invariant, already in matmul_dtype

    def step(t, h):
        zh = jnp.dot(h.astype(matmul_dtype), wh, preferred_element_type=f32)
        row = pl.multiple_of(t * b_tile, 8)
        z = zx_s[pl.ds(row, b_tile), :] + zh
        # complexTanh == elementwise tanh on the packed [re | im] layout.
        # (Padded batch rows compute tanh(bias) != 0; they are sliced away in
        #  the wrapper and never reduced over in-kernel.)
        h = jnp.tanh(z)
        y_ref[pl.ds(row, b_tile), :] = h.astype(y_ref.dtype)
        return h

    h_s[...] = lax.fori_loop(0, t_block, step, h_s[...], unroll=unroll)


def crnn_layer(x_t, h0_2, wx_block, wh_block, b_block, *, b_tile, t_block,
               matmul_dtype, out_dtype, vmem_limit, unroll):
    """One cRNNCell layer over the whole (padded, packed, batch-tiled) sequence.

    x_t:      (num_bt, seq_pad*b_tile, 2*I_pad)   packed [re|im] input, per-tile rows
    h0_2:     (batch_pad, 2*H_pad)                packed initial hidden state (f32)
    wx_block: (2*I_pad, 2*H_pad)                  block complex weight (matmul_dtype)
    wh_block: (2*H_pad, 2*H_pad)                  block complex weight (matmul_dtype)
    b_block:  (1, 2*H_pad)                        packed combined bias (f32)
    returns   (num_bt, seq_pad*b_tile, 2*H_pad)   packed output sequence
    """
    num_bt, rows, two_i = x_t.shape
    two_h = wh_block.shape[1]
    num_tb = rows // (b_tile * t_block)

    kernel = functools.partial(
        crnn_layer_kernel, t_block=t_block, b_tile=b_tile,
        matmul_dtype=matmul_dtype, unroll=unroll)

    # Grid-invariant operands: a single resident VMEM copy (no double buffering).
    resident = pl.Buffered(1)

    grid_spec = pltpu.PrefetchScalarGridSpec(
        num_scalar_prefetch=0,
        grid=(num_bt, num_tb),
        in_specs=[
            pl.BlockSpec((pl.Squeezed(), t_block * b_tile, two_i),
                         lambda bt, tb: (bt, tb, 0)),                    # x
            pl.BlockSpec((b_tile, two_h), lambda bt, tb: (bt, 0)),       # h0
            pl.BlockSpec((two_i, two_h), lambda bt, tb: (0, 0),
                         pipeline_mode=resident),                        # Wx
            pl.BlockSpec((two_h, two_h), lambda bt, tb: (0, 0),
                         pipeline_mode=resident),                        # Wh
            pl.BlockSpec((1, two_h), lambda bt, tb: (0, 0),
                         pipeline_mode=resident),                        # bias
        ],
        out_specs=pl.BlockSpec((pl.Squeezed(), t_block * b_tile, two_h),
                               lambda bt, tb: (bt, tb, 0)),
        scratch_shapes=[pltpu.VMEM((b_tile, two_h), jnp.float32),            # h state
                        pltpu.VMEM((t_block * b_tile, two_h), jnp.float32)],  # zx
    )

    return pl.pallas_call(
        kernel,
        out_shape=jax.ShapeDtypeStruct((num_bt, rows, two_h), out_dtype),
        grid_spec=grid_spec,
        compiler_params=pltpu.CompilerParams(
            # batch tiles are independent (shard across v7x TCs); the time
            # recurrence is sequential.
            dimension_semantics=("parallel", "arbitrary"),
            vmem_limit_bytes=vmem_limit),
    )(x_t, h0_2, wx_block, wh_block, b_block)


# ----------------------------------------------------------------------------
# Packing helpers (zero-padding is mathematically inert for this cell).
# ----------------------------------------------------------------------------
def _block_weight(wr, wi, in_pad, out_pad):
    """[[Wr, Wi], [-Wi, Wr]] with zero padding; wr/wi are (in, out)."""
    i, o = wr.shape
    wr_p = jnp.zeros((in_pad, out_pad), jnp.float32).at[:i, :o].set(wr)
    wi_p = jnp.zeros((in_pad, out_pad), jnp.float32).at[:i, :o].set(wi)
    return jnp.concatenate(
        [jnp.concatenate([wr_p, wi_p], axis=1),
         jnp.concatenate([-wi_p, wr_p], axis=1)], axis=0)


def crnn_forward(seq_r, seq_i, h0_r, h0_i, layer_params, *,
                 t_block=64, matmul_dtype=jnp.float32):
    """cRNN forward. Returns (output complex64 [seq,b,h], h_n complex64 [L,b,h])."""
    seq_len, batch, input_size = seq_r.shape
    hidden = layer_params[0][0].shape[1]   # wxr is (in, hidden)

    io_dtype = jnp.dtype(matmul_dtype)     # activation-stream dtype (HBM x / y)
    io_bytes = io_dtype.itemsize
    w_bytes = io_bytes

    sublane = _SUBLANE if io_bytes >= 4 else 16   # bf16 packs 16 rows / vreg
    b_pad = _round_up(batch, sublane)
    i_pad = _round_up(input_size, _HALF_LANE)
    h_pad = _round_up(hidden, _HALF_LANE)
    two_i0, two_h = 2 * i_pad, 2 * h_pad

    # Batch tiling: split into 2 tiles when big enough so v7x's two TensorCores
    # each take one (no-op on v5e/v6e and for small batch).
    if b_pad >= 2 * sublane and b_pad % (2 * sublane) == 0:
        b_tile = b_pad // 2
    else:
        b_tile = b_pad
    num_bt = b_pad // b_tile

    # Pick the largest t_block that fits the per-generation VMEM budget.
    cap = _vmem_capacity_bytes()
    budget = int(cap * 0.85)               # leave headroom for compiler scratch
    t_block = max(1, min(t_block, seq_len))
    worst_two_i = max(two_i0, two_h)
    while t_block > 1 and _layer_vmem_bytes(
            t_block, b_tile, worst_two_i, two_h, io_bytes, w_bytes) > budget:
        t_block //= 2
    need = _layer_vmem_bytes(t_block, b_tile, worst_two_i, two_h, io_bytes, w_bytes)
    vmem_limit = int(min(max(int(need * 1.25) + (4 << 20), 16 << 20), budget))
    unroll = int(min(t_block, 8))
    seq_pad = _round_up(seq_len, t_block)

    # Pack the input sequence: [re | im], padded.
    x3 = jnp.zeros((seq_pad, b_pad, two_i0), io_dtype)
    x3 = x3.at[:seq_len, :batch, :input_size].set(seq_r.astype(io_dtype))
    x3 = x3.at[:seq_len, :batch, i_pad:i_pad + input_size].set(seq_i.astype(io_dtype))
    # Per-batch-tile contiguous rows: (num_bt, seq_pad*b_tile, 2I) so the kernel
    # sees flat lane-dense 2D tiles (no in-kernel reshapes).
    x_t = (x3.reshape(seq_pad, num_bt, b_tile, two_i0)
             .transpose(1, 0, 2, 3)
             .reshape(num_bt, seq_pad * b_tile, two_i0))

    finals = []
    y_t = x_t
    for l, (wxr, wxi, whr, whi, br, bi) in enumerate(layer_params):
        ip = i_pad if l == 0 else h_pad
        # Weights cast to matmul_dtype HERE (resident in that dtype; no per-grid-
        # step cast in the kernel).
        wx_block = _block_weight(wxr, wxi, ip, h_pad).astype(matmul_dtype)
        wh_block = _block_weight(whr, whi, h_pad, h_pad).astype(matmul_dtype)
        b_block = jnp.zeros((1, two_h), jnp.float32)
        b_block = b_block.at[:, :hidden].set(br)
        b_block = b_block.at[:, h_pad:h_pad + hidden].set(bi)

        h0_2 = jnp.zeros((b_pad, two_h), jnp.float32)
        h0_2 = h0_2.at[:batch, :hidden].set(h0_r[l])
        h0_2 = h0_2.at[:batch, h_pad:h_pad + hidden].set(h0_i[l])

        y_t = crnn_layer(y_t, h0_2, wx_block, wh_block, b_block,
                         b_tile=b_tile, t_block=t_block,
                         matmul_dtype=matmul_dtype, out_dtype=io_dtype,
                         vmem_limit=vmem_limit, unroll=unroll)

        # Final hidden of this layer = output at the last *real* timestep.
        y4 = y_t.reshape(num_bt, seq_pad, b_tile, two_h)
        hn = y4[:, seq_len - 1].reshape(b_pad, two_h)[:batch].astype(jnp.float32)
        finals.append(hn[:, :hidden] + 1j * hn[:, h_pad:h_pad + hidden])

    y3 = (y_t.reshape(num_bt, seq_pad, b_tile, two_h)
             .transpose(1, 0, 2, 3)
             .reshape(seq_pad, b_pad, two_h))[:seq_len, :batch].astype(jnp.float32)
    output = y3[..., :hidden] + 1j * y3[..., h_pad:h_pad + hidden]
    h_n = jnp.stack(finals)
    return output.astype(jnp.complex64), h_n.astype(jnp.complex64)


# ----------------------------------------------------------------------------
# Deterministic parameter init (xavier-uniform-style bounds, complex split).
# Weights stored pre-transposed: [in_features, out_features].
# ----------------------------------------------------------------------------
def init_clinear(key, in_features, out_features):
    kw_r, kw_i, kb_r, kb_i = jax.random.split(key, 4)
    bound_w = (6.0 / (in_features + out_features)) ** 0.5
    bound_b = (6.0 / (out_features + 1)) ** 0.5
    wr = jax.random.uniform(kw_r, (in_features, out_features), jnp.float32,
                            -bound_w, bound_w)
    wi = jax.random.uniform(kw_i, (in_features, out_features), jnp.float32,
                            -bound_w, bound_w)
    br = jax.random.uniform(kb_r, (1, out_features), jnp.float32, -bound_b, bound_b)
    bi = jax.random.uniform(kb_i, (1, out_features), jnp.float32, -bound_b, bound_b)
    return wr, wi, br, bi


def init_crnn(key, input_size, hidden_size, num_layers):
    params = []
    for l in range(num_layers):
        key, kx, kh = jax.random.split(key, 3)
        in_sz = input_size if l == 0 else hidden_size
        wxr, wxi, bxr, bxi = init_clinear(kx, in_sz, hidden_size)
        whr, whi, bhr, bhi = init_clinear(kh, hidden_size, hidden_size)
        # Wx and Wh biases are both added in the cell; combine them.
        params.append((wxr, wxi, whr, whi, bxr + bhr, bxi + bhi))
    return params


# ----------------------------------------------------------------------------
# Pure-JAX (complex64) reference for verification.
# ----------------------------------------------------------------------------
def ref_crnn(seq_c, h0_c, layer_params):
    final = []
    for l, (wxr, wxi, whr, whi, br, bi) in enumerate(layer_params):
        wx = (wxr + 1j * wxi).astype(jnp.complex64)
        wh = (whr + 1j * whi).astype(jnp.complex64)
        b = (br + 1j * bi).astype(jnp.complex64)
        h = h0_c[l]
        outs = []
        for t in range(seq_c.shape[0]):
            z = seq_c[t] @ wx + h @ wh + b
            h = jnp.tanh(jnp.real(z)) + 1j * jnp.tanh(jnp.imag(z))
            outs.append(h)
        seq_c = jnp.stack(outs)
        final.append(h)
    return seq_c, jnp.stack(final)


if __name__ == "__main__":
    seq_len, batch, input_size, hidden_size, num_layers = 8, 2, 4, 32, 2

    key = jax.random.PRNGKey(0)
    k_seq_r, k_seq_i, k_h_r, k_h_i, k_params = jax.random.split(key, 5)

    seq_r = jax.random.normal(k_seq_r, (seq_len, batch, input_size), jnp.float32)
    seq_i = jax.random.normal(k_seq_i, (seq_len, batch, input_size), jnp.float32)
    h0_r = jax.random.normal(k_h_r, (num_layers, batch, hidden_size), jnp.float32)
    h0_i = jax.random.normal(k_h_i, (num_layers, batch, hidden_size), jnp.float32)

    params = init_crnn(k_params, input_size, hidden_size, num_layers)

    # f32 matmuls for exact validation; pass matmul_dtype=jnp.bfloat16 on
    # v6e/v7x for throughput (validate with a looser, measured tolerance).
    output, h_n = crnn_forward(seq_r, seq_i, h0_r, h0_i, params,
                               t_block=64, matmul_dtype=jnp.float32)
    output = jax.block_until_ready(output)
    h_n = jax.block_until_ready(h_n)

    # Verify against the pure-JAX complex reference.
    seq_c = (seq_r + 1j * seq_i).astype(jnp.complex64)
    h0_c = (h0_r + 1j * h0_i).astype(jnp.complex64)
    ref_out, ref_hn = ref_crnn(seq_c, h0_c, params)

    assert output.shape == (seq_len, batch, hidden_size)
    assert h_n.shape == (num_layers, batch, hidden_size)
    assert jnp.allclose(output, ref_out, atol=1e-5, rtol=1e-5)
    assert jnp.allclose(h_n, ref_hn, atol=1e-5, rtol=1e-5)
    # invariant asserted in the torch module
    assert jnp.allclose(output[-1], h_n[-1], atol=1e-6)

    print("KERNEL_OK")
</pallas_src>

<mosaic_0001>
module attributes {stable_mosaic.version = 11 : i64} {
  func.func @crnn_layer_kernel(%arg0: i32, %arg1: i32, %arg2: memref<1x64x128xf32, #tpu.memory_space<vmem>>, %arg3: memref<8x128xf32, #tpu.memory_space<vmem>>, %arg4: memref<128x128xf32, #tpu.memory_space<vmem>>, %arg5: memref<128x128xf32, #tpu.memory_space<vmem>>, %arg6: memref<1x128xf32, #tpu.memory_space<vmem>>, %arg7: memref<1x64x128xf32, #tpu.memory_space<vmem>>, %arg8: memref<8x128xf32, #tpu.memory_space<vmem>>, %arg9: memref<64x128xf32, #tpu.memory_space<vmem>>) attributes {dimension_semantics = [#tpu.dimension_semantics<parallel>, #tpu.dimension_semantics<arbitrary>], iteration_bounds = array<i64: 1, 1>, scalar_prefetch = 0 : i64, scratch_operands = 2 : i64, tpu.core_type = #tpu.core_type<tc>, window_params = [{transform_indices = @transform_0, window_bounds = array<i64: 1, 64, 128>}, {transform_indices = @transform_1, window_bounds = array<i64: 8, 128>}, {pipeline_mode = #tpu.pipeline_mode<synchronous>, transform_indices = @transform_2, window_bounds = array<i64: 128, 128>}, {pipeline_mode = #tpu.pipeline_mode<synchronous>, transform_indices = @transform_3, window_bounds = array<i64: 128, 128>}, {pipeline_mode = #tpu.pipeline_mode<synchronous>, transform_indices = @transform_4, window_bounds = array<i64: 1, 128>}, {transform_indices = @transform_5, window_bounds = array<i64: 1, 64, 128>}]} {
    %c0_i32 = arith.constant 0 : i32
    %0 = arith.cmpi eq, %arg1, %c0_i32 : i32
    %1 = arith.extui %0 : i1 to i32
    %c0_i32_0 = arith.constant 0 : i32
    %2 = arith.cmpi ne, %1, %c0_i32_0 : i32
    scf.if %2 {
      %c0_56 = arith.constant 0 : index
      %c0_57 = arith.constant 0 : index
      %102 = vector.load %arg3[%c0_56, %c0_57] : memref<8x128xf32, #tpu.memory_space<vmem>>, vector<8x128xf32>
      %c0_58 = arith.constant 0 : index
      %c0_59 = arith.constant 0 : index
      %103 = vector.load %arg8[%c0_58, %c0_59] : memref<8x128xf32, #tpu.memory_space<vmem>>, vector<8x128xf32>
      tpu.vector_store %arg8[%c0_58, %c0_59], %102 {strides = array<i32>} : memref<8x128xf32, #tpu.memory_space<vmem>>, vector<8x128xf32>,
    } else {
    }
    %c0 = arith.constant 0 : index
    %c0_1 = arith.constant 0 : index
    %c0_2 = arith.constant 0 : index
    %3 = vector.load %arg2[%c0, %c0_1, %c0_2] : memref<1x64x128xf32, #tpu.memory_space<vmem>>, vector<1x64x128xf32>
    %4 = vector.shape_cast %3 : vector<1x64x128xf32> to vector<64x128xf32>
    %c0_3 = arith.constant 0 : index
    %c0_4 = arith.constant 0 : index
    %5 = vector.load %arg4[%c0_3, %c0_4] : memref<128x128xf32, #tpu.memory_space<vmem>>, vector<128x128xf32>
    %cst = arith.constant dense<0.000000e+00> : vector<64x128xf32>
    %6 = tpu.matmul %4, %5, %cst {dimension_numbers = #tpu.dot_dimension_numbers<[1], [0], [0], [1], [0, 0, 1, 1], [], []>} : vector<64x128xf32>, vector<128x128xf32>, vector<64x128xf32> -> vector<64x128xf32>
    %c0_5 = arith.constant 0 : index
    %c0_6 = arith.constant 0 : index
    %7 = vector.load %arg6[%c0_5, %c0_6] : memref<1x128xf32, #tpu.memory_space<vmem>>, vector<1x128xf32>
    %8 = vector.broadcast %7 : vector<1x128xf32> to vector<64x128xf32>
    %9 = arith.addf %6, %8 : vector<64x128xf32>
    %c0_7 = arith.constant 0 : index
    %c0_8 = arith.constant 0 : index
    %10 = vector.load %arg9[%c0_7, %c0_8] : memref<64x128xf32, #tpu.memory_space<vmem>>, vector<64x128xf32>
    tpu.vector_store %arg9[%c0_7, %c0_8], %9 {strides = array<i32>} : memref<64x128xf32, #tpu.memory_space<vmem>>, vector<64x128xf32>,
    %c0_9 = arith.constant 0 : index
    %c0_10 = arith.constant 0 : index
    %11 = vector.load %arg5[%c0_9, %c0_10] : memref<128x128xf32, #tpu.memory_space<vmem>>, vector<128x128xf32>
    %c0_11 = arith.constant 0 : index
    %c0_12 = arith.constant 0 : index
    %12 = vector.load %arg8[%c0_11, %c0_12] : memref<8x128xf32, #tpu.memory_space<vmem>>, vector<8x128xf32>
    %c0_i32_13 = arith.constant 0 : i32
    %cst_14 = arith.constant dense<0.000000e+00> : vector<8x128xf32>
    %13 = tpu.matmul %12, %11, %cst_14 {dimension_numbers = #tpu.dot_dimension_numbers<[1], [0], [0], [1], [0, 0, 1, 1], [], []>} : vector<8x128xf32>, vector<128x128xf32>, vector<8x128xf32> -> vector<8x128xf32>
    %c8_i32 = arith.constant 8 : i32
    %14 = arith.muli %c0_i32_13, %c8_i32 : i32
    %15 = tpu.assume_multiple %14, 8 : i32
    %16 = arith.index_cast %15 : i32 to index
    %c0_15 = arith.constant 0 : index
    %17 = vector.load %arg9[%16, %c0_15] : memref<64x128xf32, #tpu.memory_space<vmem>>, vector<8x128xf32>
    %18 = arith.addf %17, %13 : vector<8x128xf32>
    %19 = math.tanh %18 : vector<8x128xf32>
    %c0_16 = arith.constant 0 : index
    %20 = arith.index_cast %15 : i32 to index
    %c0_17 = arith.constant 0 : index
    %21 = vector.load %arg7[%c0_16, %20, %c0_17] : memref<1x64x128xf32, #tpu.memory_space<vmem>>, vector<1x8x128xf32>
    %22 = vector.shape_cast %21 : vector<1x8x128xf32> to vector<8x128xf32>
    %23 = vector.shape_cast %19 : vector<8x128xf32> to vector<1x8x128xf32>
    tpu.vector_store %arg7[%c0_16, %20, %c0_17], %23 {strides = array<i32>} : memref<1x64x128xf32, #tpu.memory_space<vmem>>, vector<1x8x128xf32>,
    %c1_i32 = arith.constant 1 : i32
    %cst_18 = arith.constant dense<0.000000e+00> : vector<8x128xf32>
    %24 = tpu.matmul %19, %11, %cst_18 {dimension_numbers = #tpu.dot_dimension_numbers<[1], [0], [0], [1], [0, 0, 1, 1], [], []>} : vector<8x128xf32>, vector<128x128xf32>, vector<8x128xf32> -> vector<8x128xf32>
    %c8_i32_19 = arith.constant 8 : i32
    %25 = arith.muli %c1_i32, %c8_i32_19 : i32
    %26 = tpu.assume_multiple %25, 8 : i32
    %27 = arith.index_cast %26 : i32 to index
    %c0_20 = arith.constant 0 : index
    %28 = vector.load %arg9[%27, %c0_20] : memref<64x128xf32, #tpu.memory_space<vmem>>, vector<8x128xf32>
    %29 = arith.addf %28, %24 : vector<8x128xf32>
    %30 = math.tanh %29 : vector<8x128xf32>
    %c0_21 = arith.constant 0 : index
    %31 = arith.index_cast %26 : i32 to index
    %c0_22 = arith.constant 0 : index
    %32 = vector.load %arg7[%c0_21, %31, %c0_22] : memref<1x64x128xf32, #tpu.memory_space<vmem>>, vector<1x8x128xf32>
    %33 = vector.shape_cast %32 : vector<1x8x128xf32> to vector<8x128xf32>
    %34 = vector.shape_cast %30 : vector<8x128xf32> to vector<1x8x128xf32>
    tpu.vector_store %arg7[%c0_21, %31, %c0_22], %34 {strides = array<i32>} : memref<1x64x128xf32, #tpu.memory_space<vmem>>, vector<1x8x128xf32>,
    %c2_i32 = arith.constant 2 : i32
    %cst_23 = arith.constant dense<0.000000e+00> : vector<8x128xf32>
    %35 = tpu.matmul %30, %11, %cst_23 {dimension_numbers = #tpu.dot_dimension_numbers<[1], [0], [0], [1], [0, 0, 1, 1], [], []>} : vector<8x128xf32>, vector<128x128xf32>, vector<8x128xf32> -> vector<8x128xf32>
    %c8_i32_24 = arith.constant 8 : i32
    %36 = arith.muli %c2_i32, %c8_i32_24 : i32
    %37 = tpu.assume_multiple %36, 8 : i32
    %38 = arith.index_cast %37 : i32 to index
    %c0_25 = arith.constant 0 : index
    %39 = vector.load %arg9[%38, %c0_25] : memref<64x128xf32, #tpu.memory_space<vmem>>, vector<8x128xf32>
    %40 = arith.addf %39, %35 : vector<8x128xf32>
    %41 = math.tanh %40 : vector<8x128xf32>
    %c0_26 = arith.constant 0 : index
    %42 = arith.index_cast %37 : i32 to index
    %c0_27 = arith.constant 0 : index
    %43 = vector.load %arg7[%c0_26, %42, %c0_27] : memref<1x64x128xf32, #tpu.memory_space<vmem>>, vector<1x8x128xf32>
    %44 = vector.shape_cast %43 : vector<1x8x128xf32> to vector<8x128xf32>
    %45 = vector.shape_cast %41 : vector<8x128xf32> to vector<1x8x128xf32>
    tpu.vector_store %arg7[%c0_26, %42, %c0_27], %45 {strides = array<i32>} : memref<1x64x128xf32, #tpu.memory_space<vmem>>, vector<1x8x128xf32>,
    %c3_i32 = arith.constant 3 : i32
    %cst_28 = arith.constant dense<0.000000e+00> : vector<8x128xf32>
    %46 = tpu.matmul %41, %11, %cst_28 {dimension_numbers = #tpu.dot_dimension_numbers<[1], [0], [0], [1], [0, 0, 1, 1], [], []>} : vector<8x128xf32>, vector<128x128xf32>, vector<8x128xf32> -> vector<8x128xf32>
    %c8_i32_29 = arith.constant 8 : i32
    %47 = arith.muli %c3_i32, %c8_i32_29 : i32
    %48 = tpu.assume_multiple %47, 8 : i32
    %49 = arith.index_cast %48 : i32 to index
    %c0_30 = arith.constant 0 : index
    %50 = vector.load %arg9[%49, %c0_30] : memref<64x128xf32, #tpu.memory_space<vmem>>, vector<8x128xf32>
    %51 = arith.addf %50, %46 : vector<8x128xf32>
    %52 = math.tanh %51 : vector<8x128xf32>
    %c0_31 = arith.constant 0 : index
    %53 = arith.index_cast %48 : i32 to index
    %c0_32 = arith.constant 0 : index
    %54 = vector.load %arg7[%c0_31, %53, %c0_32] : memref<1x64x128xf32, #tpu.memory_space<vmem>>, vector<1x8x128xf32>
    %55 = vector.shape_cast %54 : vector<1x8x128xf32> to vector<8x128xf32>
    %56 = vector.shape_cast %52 : vector<8x128xf32> to vector<1x8x128xf32>
    tpu.vector_store %arg7[%c0_31, %53, %c0_32], %56 {strides = array<i32>} : memref<1x64x128xf32, #tpu.memory_space<vmem>>, vector<1x8x128xf32>,
    %c4_i32 = arith.constant 4 : i32
    %cst_33 = arith.constant dense<0.000000e+00> : vector<8x128xf32>
    %57 = tpu.matmul %52, %11, %cst_33 {dimension_numbers = #tpu.dot_dimension_numbers<[1], [0], [0], [1], [0, 0, 1, 1], [], []>} : vector<8x128xf32>, vector<128x128xf32>, vector<8x128xf32> -> vector<8x128xf32>
    %c8_i32_34 = arith.constant 8 : i32
    %58 = arith.muli %c4_i32, %c8_i32_34 : i32
    %59 = tpu.assume_multiple %58, 8 : i32
    %60 = arith.index_cast %59 : i32 to index
    %c0_35 = arith.constant 0 : index
    %61 = vector.load %arg9[%60, %c0_35] : memref<64x128xf32, #tpu.memory_space<vmem>>, vector<8x128xf32>
    %62 = arith.addf %61, %57 : vector<8x128xf32>
    %63 = math.tanh %62 : vector<8x128xf32>
    %c0_36 = arith.constant 0 : index
    %64 = arith.index_cast %59 : i32 to index
    %c0_37 = arith.constant 0 : index
    %65 = vector.load %arg7[%c0_36, %64, %c0_37] : memref<1x64x128xf32, #tpu.memory_space<vmem>>, vector<1x8x128xf32>
    %66 = vector.shape_cast %65 : vector<1x8x128xf32> to vector<8x128xf32>
    %67 = vector.shape_cast %63 : vector<8x128xf32> to vector<1x8x128xf32>
    tpu.vector_store %arg7[%c0_36, %64, %c0_37], %67 {strides = array<i32>} : memref<1x64x128xf32, #tpu.memory_space<vmem>>, vector<1x8x128xf32>,
    %c5_i32 = arith.constant 5 : i32
    %cst_38 = arith.constant dense<0.000000e+00> : vector<8x128xf32>
    %68 = tpu.matmul %63, %11, %cst_38 {dimension_numbers = #tpu.dot_dimension_numbers<[1], [0], [0], [1], [0, 0, 1, 1], [], []>} : vector<8x128xf32>, vector<128x128xf32>, vector<8x128xf32> -> vector<8x128xf32>
    %c8_i32_39 = arith.constant 8 : i32
    %69 = arith.muli %c5_i32, %c8_i32_39 : i32
    %70 = tpu.assume_multiple %69, 8 : i32
    %71 = arith.index_cast %70 : i32 to index
    %c0_40 = arith.constant 0 : index
    %72 = vector.load %arg9[%71, %c0_40] : memref<64x128xf32, #tpu.memory_space<vmem>>, vector<8x128xf32>
    %73 = arith.addf %72, %68 : vector<8x128xf32>
    %74 = math.tanh %73 : vector<8x128xf32>
    %c0_41 = arith.constant 0 : index
    %75 = arith.index_cast %70 : i32 to index
    %c0_42 = arith.constant 0 : index
    %76 = vector.load %arg7[%c0_41, %75, %c0_42] : memref<1x64x128xf32, #tpu.memory_space<vmem>>, vector<1x8x128xf32>
    %77 = vector.shape_cast %76 : vector<1x8x128xf32> to vector<8x128xf32>
    %78 = vector.shape_cast %74 : vector<8x128xf32> to vector<1x8x128xf32>
    tpu.vector_store %arg7[%c0_41, %75, %c0_42], %78 {strides = array<i32>} : memref<1x64x128xf32, #tpu.memory_space<vmem>>, vector<1x8x128xf32>,
    %c6_i32 = arith.constant 6 : i32
    %cst_43 = arith.constant dense<0.000000e+00> : vector<8x128xf32>
    %79 = tpu.matmul %74, %11, %cst_43 {dimension_numbers = #tpu.dot_dimension_numbers<[1], [0], [0], [1], [0, 0, 1, 1], [], []>} : vector<8x128xf32>, vector<128x128xf32>, vector<8x128xf32> -> vector<8x128xf32>
    %c8_i32_44 = arith.constant 8 : i32
    %80 = arith.muli %c6_i32, %c8_i32_44 : i32
    %81 = tpu.assume_multiple %80, 8 : i32
    %82 = arith.index_cast %81 : i32 to index
    %c0_45 = arith.constant 0 : index
    %83 = vector.load %arg9[%82, %c0_45] : memref<64x128xf32, #tpu.memory_space<vmem>>, vector<8x128xf32>
    %84 = arith.addf %83, %79 : vector<8x128xf32>
    %85 = math.tanh %84 : vector<8x128xf32>
    %c0_46 = arith.constant 0 : index
    %86 = arith.index_cast %81 : i32 to index
    %c0_47 = arith.constant 0 : index
    %87 = vector.load %arg7[%c0_46, %86, %c0_47] : memref<1x64x128xf32, #tpu.memory_space<vmem>>, vector<1x8x128xf32>
    %88 = vector.shape_cast %87 : vector<1x8x128xf32> to vector<8x128xf32>
    %89 = vector.shape_cast %85 : vector<8x128xf32> to vector<1x8x128xf32>
    tpu.vector_store %arg7[%c0_46, %86, %c0_47], %89 {strides = array<i32>} : memref<1x64x128xf32, #tpu.memory_space<vmem>>, vector<1x8x128xf32>,
    %c7_i32 = arith.constant 7 : i32
    %cst_48 = arith.constant dense<0.000000e+00> : vector<8x128xf32>
    %90 = tpu.matmul %85, %11, %cst_48 {dimension_numbers = #tpu.dot_dimension_numbers<[1], [0], [0], [1], [0, 0, 1, 1], [], []>} : vector<8x128xf32>, vector<128x128xf32>, vector<8x128xf32> -> vector<8x128xf32>
    %c8_i32_49 = arith.constant 8 : i32
    %91 = arith.muli %c7_i32, %c8_i32_49 : i32
    %92 = tpu.assume_multiple %91, 8 : i32
    %93 = arith.index_cast %92 : i32 to index
    %c0_50 = arith.constant 0 : index
    %94 = vector.load %arg9[%93, %c0_50] : memref<64x128xf32, #tpu.memory_space<vmem>>, vector<8x128xf32>
    %95 = arith.addf %94, %90 : vector<8x128xf32>
    %96 = math.tanh %95 : vector<8x128xf32>
    %c0_51 = arith.constant 0 : index
    %97 = arith.index_cast %92 : i32 to index
    %c0_52 = arith.constant 0 : index
    %98 = vector.load %arg7[%c0_51, %97, %c0_52] : memref<1x64x128xf32, #tpu.memory_space<vmem>>, vector<1x8x128xf32>
    %99 = vector.shape_cast %98 : vector<1x8x128xf32> to vector<8x128xf32>
    %100 = vector.shape_cast %96 : vector<8x128xf32> to vector<1x8x128xf32>
    tpu.vector_store %arg7[%c0_51, %97, %c0_52], %100 {strides = array<i32>} : memref<1x64x128xf32, #tpu.memory_space<vmem>>, vector<1x8x128xf32>,
    %c8_i32_53 = arith.constant 8 : i32
    %c0_54 = arith.constant 0 : index
    %c0_55 = arith.constant 0 : index
    %101 = vector.load %arg8[%c0_54, %c0_55] : memref<8x128xf32, #tpu.memory_space<vmem>>, vector<8x128xf32>
    tpu.vector_store %arg8[%c0_54, %c0_55], %96 {strides = array<i32>} : memref<8x128xf32, #tpu.memory_space<vmem>>, vector<8x128xf32>,
    return
  }
  func.func @transform_0(%arg0: i32, %arg1: i32) -> (i32, i32, i32) {
    %c0_i32 = arith.constant 0 : i32
    %c0_i32_0 = arith.constant 0 : i32
    return %arg0, %arg1, %c0_i32 : i32, i32, i32
  }
  func.func @transform_1(%arg0: i32, %arg1: i32) -> (i32, i32) {
    %c0_i32 = arith.constant 0 : i32
    %c0_i32_0 = arith.constant 0 : i32
    return %arg0, %c0_i32 : i32, i32
  }
  func.func @transform_2(%arg0: i32, %arg1: i32) -> (i32, i32) {
    %c0_i32 = arith.constant 0 : i32
    %c0_i32_0 = arith.constant 0 : i32
    %c0_i32_1 = arith.constant 0 : i32
    return %c0_i32, %c0_i32_0 : i32, i32
  }
  func.func @transform_3(%arg0: i32, %arg1: i32) -> (i32, i32) {
    %c0_i32 = arith.constant 0 : i32
    %c0_i32_0 = arith.constant 0 : i32
    %c0_i32_1 = arith.constant 0 : i32
    return %c0_i32, %c0_i32_0 : i32, i32
  }
  func.func @transform_4(%arg0: i32, %arg1: i32) -> (i32, i32) {
    %c0_i32 = arith.constant 0 : i32
    %c0_i32_0 = arith.constant 0 : i32
    %c0_i32_1 = arith.constant 0 : i32
    return %c0_i32, %c0_i32_0 : i32, i32
  }
  func.func @transform_5(%arg0: i32, %arg1: i32) -> (i32, i32, i32) {
    %c0_i32 = arith.constant 0 : i32
    %c0_i32_0 = arith.constant 0 : i32
    return %arg0, %arg1, %c0_i32 : i32, i32, i32
  }
}

</mosaic_0001>

<llo_original>
// kernel: tpu_custom_call.1
$region0: #{tpu_custom_call.1}
  #allocation0 [shape = 'u32[]', space=smem, size = 0x4, offset = 0x4, fixed_abs, tag = 'smem constant byte address 0x4 - core index']
  #allocation1 [shape = 'u32[144,128]{1,0:T(1,128)}', space=vmem, size = 0x12000, scoped, tag = 'internal scratch']
  #allocation2 [shape = 'f32[8,128]{1,0:T(8,128)}', space=vmem, size = 0x1000, scoped, tag = 'scratch operand']
  #allocation3 [shape = 'f32[64,128]{1,0:T(8,128)}', space=vmem, size = 0x8000, scoped, tag = 'scratch operand']
  %s0 = inlined_call_operand.hbm [shape: f32[1,64,128], index: 0, kind: input, shape index: {}]
  %s1 = inlined_call_operand.hbm [shape: f32[8,128], index: 1, kind: input, shape index: {}]
  %s2 = inlined_call_operand.hbm [shape: f32[128,128], index: 2, kind: input, shape index: {}]
  %s3 = inlined_call_operand.hbm [shape: f32[128,128], index: 3, kind: input, shape index: {}]
  %s4 = inlined_call_operand.vmem [shape: f32[1,128], index: 4, kind: input, shape index: {}]
  %s5 = inlined_call_operand.hbm [shape: f32[1,64,128], index: 5, kind: output, shape index: {}]
  %s6 = sld [smem:[#allocation0]]
  $region50: #{tpu_custom_call.1} parent=0
    _
  %s8 = ssub.s32 1, %s6
  %s9 = scalar_select 0, %s8, %s6
  $region1: #{tpu_custom_call.1} parent=0
    #allocation4 [shape = 'u8[32768]{0}', space=vmem, size = 0x8000, scoped, tag = 'input window, operand 0, single buffered']
    #allocation5 [shape = 's32[1]{0}', space=sflag, size = 0x4, scoped, tag = 'scoped memory for tpu_custom_call.1']
    #allocation6 [shape = 's32[1]{0}', space=sflag, size = 0x4, scoped, tag = 'scoped memory for tpu_custom_call.1']
    #allocation7 [shape = 'u8[4096]{0}', space=vmem, size = 0x1000, scoped, tag = 'input window, operand 1, single buffered']
    #allocation8 [shape = 's32[1]{0}', space=sflag, size = 0x4, scoped, tag = 'scoped memory for tpu_custom_call.1']
    #allocation9 [shape = 'u8[65536]{0}', space=vmem, size = 0x10000, scoped, tag = 'input window, operand 2, single buffered']
    #allocation10 [shape = 'u8[65536]{0}', space=vmem, size = 0x10000, scoped, tag = 'input window, operand 3, single buffered']
    #allocation11 [shape = 's32[1]{0}', space=sflag, size = 0x4, scoped, tag = 'scoped memory for tpu_custom_call.1']
    #allocation12 [shape = 'u8[32768]{0}', space=vmem, size = 0x8000, scoped, tag = 'output window, operand 0, single buffered']
    %10 = vsyncpa [#allocation5], 0
    %11 = vsyncpa [#allocation8], 0
    %12 = vsyncpa [#allocation11], 0
    %13 = vsyncpa [#allocation6], 0
    // Predicated region
    $region2: #{tpu_custom_call.1} parent=1 // pred_check
      _
    $region3: #{tpu_custom_call.1} parent=1 // pred_check_branch
      %15 = sbr.rel (0) target = $region5
    $region4: #{tpu_custom_call.1} parent=1 // pred_region
      %s17 = ssub.s32 1024, 1024
      %18 = vsyncadd [#allocation5], %s17
      %s19 = sshll.u32 [#allocation4], 4
      %s20 = int_to_ptr.vmem [resolvable:$true] %s19
      %25 = dma.hbm_to_vmem [thread:$0]  %s0, 1024, %s20, [#allocation5], 128, 128, 8
    $region5: #{tpu_custom_call.1} parent=1 // pred_fallthru
      _
    // Predicated region
    $region6: #{tpu_custom_call.1} parent=1 // pred_check
      _
    $region7: #{tpu_custom_call.1} parent=1 // pred_check_branch
      %27 = sbr.rel (0) target = $region9
    $region8: #{tpu_custom_call.1} parent=1 // pred_region
      %s29 = ssub.s32 128, 128
      %30 = vsyncadd [#allocation8], %s29
      %s32 = sshll.u32 [#allocation7], 4
      %s33 = int_to_ptr.vmem [resolvable:$true] %s32
      %35 = dma.hbm_to_vmem [thread:$0]  %s1, 128, %s33, [#allocation8]
    $region9: #{tpu_custom_call.1} parent=1 // pred_fallthru
      _
    // Predicated region
    $region10: #{tpu_custom_call.1} parent=1 // pred_check
      _
    $region11: #{tpu_custom_call.1} parent=1 // pred_check_branch
      %37 = sbr.rel (0) target = $region13
    $region12: #{tpu_custom_call.1} parent=1 // pred_region
      %s39 = ssub.s32 2048, 2048
      %40 = vsyncadd [#allocation8], %s39
      %s41 = sshll.u32 [#allocation9], 4
      %s42 = int_to_ptr.vmem [resolvable:$true] %s41
      %47 = dma.hbm_to_vmem [thread:$0]  %s2, 2048, %s42, [#allocation8], 128, 128, 8
    $region13: #{tpu_custom_call.1} parent=1 // pred_fallthru
      _
    // Predicated region
    $region14: #{tpu_custom_call.1} parent=1 // pred_check
      _
    $region15: #{tpu_custom_call.1} parent=1 // pred_check_branch
      %49 = sbr.rel (0) target = $region17
    $region16: #{tpu_custom_call.1} parent=1 // pred_region
      %s51 = ssub.s32 2048, 2048
      %52 = vsyncadd [#allocation11], %s51
      %s53 = sshll.u32 [#allocation10], 4
      %s54 = int_to_ptr.vmem [resolvable:$true] %s53
      %59 = dma.hbm_to_vmem [thread:$0]  %s3, 2048, %s54, [#allocation11], 128, 128, 8
    $region17: #{tpu_custom_call.1} parent=1 // pred_fallthru
      _
    // Predicated region
    $region18: #{tpu_custom_call.1} parent=1 // pred_check
      _
    $region19: #{tpu_custom_call.1} parent=1 // pred_check_branch
      %61 = sbr.rel (0) target = $region21
    $region20: #{tpu_custom_call.1} parent=1 // pred_region
      _
    $region21: #{tpu_custom_call.1} parent=1 // pred_fallthru
      _
    // Predicated region
    $region22: #{tpu_custom_call.1} parent=1 // pred_check
      _
    $region23: #{tpu_custom_call.1} parent=1 // pred_check_branch
      %63 = sbr.rel (0) target = $region25
    $region24: #{tpu_custom_call.1} parent=1 // pred_region
      %64 = dma.done [#allocation5], 1024
    $region25: #{tpu_custom_call.1} parent=1 // pred_fallthru
      _
    // Predicated region
    $region26: #{tpu_custom_call.1} parent=1 // pred_check
      _
    $region27: #{tpu_custom_call.1} parent=1 // pred_check_branch
      %66 = sbr.rel (0) target = $region29
    $region28: #{tpu_custom_call.1} parent=1 // pred_region
      %67 = dma.done [#allocation8], 128
    $region29: #{tpu_custom_call.1} parent=1 // pred_fallthru
      _
    // Predicated region
    $region30: #{tpu_custom_call.1} parent=1 // pred_check
      _
    $region31: #{tpu_custom_call.1} parent=1 // pred_check_branch
      %69 = sbr.rel (0) target = $region33
    $region32: #{tpu_custom_call.1} parent=1 // pred_region
      %70 = dma.done [#allocation8], 2048
    $region33: #{tpu_custom_call.1} parent=1 // pred_fallthru
      _
    // Predicated region
    $region34: #{tpu_custom_call.1} parent=1 // pred_check
      _
    $region35: #{tpu_custom_call.1} parent=1 // pred_check_branch
      %72 = sbr.rel (0) target = $region37
    $region36: #{tpu_custom_call.1} parent=1 // pred_region
      %73 = dma.done [#allocation11], 2048
    $region37: #{tpu_custom_call.1} parent=1 // pred_fallthru
      _
    %p74 = scmp.eq.s32.totalorder 0, 0
    // Predicated region
    $region38: #{tpu_custom_call.1} parent=1 // pred_check
      %p75 = pneg %p74
    $region39: #{tpu_custom_call.1} parent=1 // pred_check_branch
      %77 = sbr.rel (%p75) target = $region41
    $region40: #{tpu_custom_call.1} parent=1 // pred_region
      %v78 = vld [vmem:[#allocation7] sm:$0xff]
      %79 = vst [vmem:[#allocation2] sm:$0xff] %v78
    $region41: #{tpu_custom_call.1} parent=1 // pred_fallthru
      _
    %v80 = vld [vmem:[#allocation4] sm:$0xff]
    %v81 = vld [vmem:[#allocation4 + $0x8] sm:$0xff]
    %v82 = vld [vmem:[#allocation4 + $0x10] sm:$0xff]
    %v83 = vld [vmem:[#allocation4 + $0x18] sm:$0xff]
    %v84 = vld [vmem:[#allocation4 + $0x20] sm:$0xff]
    %v85 = vld [vmem:[#allocation4 + $0x28] sm:$0xff]
    %v86 = vld [vmem:[#allocation4 + $0x30] sm:$0xff]
    %v87 = vld [vmem:[#allocation4 + $0x38] sm:$0xff]
    %v88 = vld [vmem:[#allocation9] sm:$0xff]
    %v89 = vld [vmem:[#allocation9 + $0x8] sm:$0xff]
    %v90 = vld [vmem:[#allocation9 + $0x10] sm:$0xff]
    %v91 = vld [vmem:[#allocation9 + $0x18] sm:$0xff]
    %v92 = vld [vmem:[#allocation9 + $0x20] sm:$0xff]
    %v93 = vld [vmem:[#allocation9 + $0x28] sm:$0xff]
    %v94 = vld [vmem:[#allocation9 + $0x30] sm:$0xff]
    %v95 = vld [vmem:[#allocation9 + $0x38] sm:$0xff]
    %v96 = vld [vmem:[#allocation9 + $0x40] sm:$0xff]
    %v97 = vld [vmem:[#allocation9 + $0x48] sm:$0xff]
    %v98 = vld [vmem:[#allocation9 + $0x50] sm:$0xff]
    %v99 = vld [vmem:[#allocation9 + $0x58] sm:$0xff]
    %v100 = vld [vmem:[#allocation9 + $0x60] sm:$0xff]
    %v101 = vld [vmem:[#allocation9 + $0x68] sm:$0xff]
    %v102 = vld [vmem:[#allocation9 + $0x70] sm:$0xff]
    %v103 = vld [vmem:[#allocation9 + $0x78] sm:$0xff]
    %v104 = vld [vmem:[%s4] sm:$0x1]
    %v106 = vlaneseq
    %v107 = vshrl.u32 %v106, 7
    %v108 = vsub.s32 0, %v107
    %v109 = vrot.slane %v104, %v108
    %111 = vmatprep.subr.mxu0 0.0
    %112 = vmatpush1.msra.mxu0 %v88
    %113 = vmatprep.subr.mxu0 0.0
    %114 = vmatpush1.msra.mxu0 %v89
    %115 = vmatprep.subr.mxu0 0.0
    %116 = vmatpush1.msra.mxu0 %v90
    %117 = vmatprep.subr.mxu0 0.0
    %118 = vmatpush1.msra.mxu0 %v91
    %119 = vmatprep.subr.mxu0 0.0
    %120 = vmatpush1.msra.mxu0 %v92
    %121 = vmatprep.subr.mxu0 0.0
    %122 = vmatpush1.msra.mxu0 %v93
    %123 = vmatprep.subr.mxu0 0.0
    %124 = vmatpush1.msra.mxu0 %v94
    %125 = vmatprep.subr.mxu0 0.0
    %126 = vmatpush1.msra.mxu0 %v95
    %127 = vmatprep.subr.mxu0 0.0
    %128 = vmatpush1.msra.mxu0 %v96
    %129 = vmatprep.subr.mxu0 0.0
    %130 = vmatpush1.msra.mxu0 %v97
    %131 = vmatprep.subr.mxu0 0.0
    %132 = vmatpush1.msra.mxu0 %v98
    %133 = vmatprep.subr.mxu0 0.0
    %134 = vmatpush1.msra.mxu0 %v99
    %135 = vmatprep.subr.mxu0 0.0
    %136 = vmatpush1.msra.mxu0 %v100
    %137 = vmatprep.subr.mxu0 0.0
    %138 = vmatpush1.msra.mxu0 %v101
    %139 = vmatprep.subr.mxu0 0.0
    %140 = vmatpush1.msra.mxu0 %v102
    %141 = vmatprep.subr.mxu0 0.0
    %142 = vmatpush1.msra.mxu0 %v103
    %143 = vmatprep.subr.mxu0 0.0
    %144 = vmatpush1.msra.mxu0 0.0
    %145 = vmatprep.subr.mxu0 0.0
    %146 = vmatpush1.msra.mxu0 0.0
    %147 = vmatprep.subr.mxu0 0.0
    %148 = vmatpush1.msra.mxu0 0.0
    %149 = vmatprep.subr.mxu0 0.0
    %150 = vmatpush1.msra.mxu0 0.0
    %151 = vmatprep.subr.mxu0 0.0
    %152 = vmatpush1.msra.mxu0 0.0
    %153 = vmatprep.subr.mxu0 0.0
    %154 = vmatpush1.msra.mxu0 0.0
    %155 = vmatprep.subr.mxu0 0.0
    %156 = vmatpush1.msra.mxu0 0.0
    %157 = vmatprep.subr.mxu0 0.0
    %158 = vmatpush1.msra.mxu0 0.0
    %159 = vmatprep.subr.mxu0 0.0
    %160 = vmatpush1.msra.mxu0 0.0
    %161 = vmatprep.subr.mxu0 0.0
    %162 = vmatpush1.msra.mxu0 0.0
    %163 = vmatprep.subr.mxu0 0.0
    %164 = vmatpush1.msra.mxu0 0.0
    %165 = vmatprep.subr.mxu0 0.0
    %166 = vmatpush1.msra.mxu0 0.0
    %167 = vmatprep.subr.mxu0 0.0
    %168 = vmatpush1.msra.mxu0 0.0
    %169 = vmatprep.subr.mxu0 0.0
    %170 = vmatpush1.msra.mxu0 0.0
    %171 = vmatprep.subr.mxu0 0.0
    %172 = vmatpush1.msra.mxu0 0.0
    %173 = vmatprep.subr.mxu0 0.0
    %174 = vmatpush1.msra.mxu0 0.0
    %175 = vmatprep.mubr.f32.mxu0 0.0
    %176 = vmatmul.mubr.f32.gmra.mrb[0].mxu0 %v80
    %v177 = vpop.f32.mrb[0].mxu0
    %v178 = vadd.f32 %v109, %v177
    %v179 = vpop.f32.mrb[0].mxu0
    %180 = vmatprep.mubr.f32.mxu0 0.0
    %181 = vmatmul.mubr.f32.gmra.mrb[0].mxu0 %v81
    %v182 = vpop.f32.mrb[0].mxu0
    %v183 = vadd.f32 %v109, %v182
    %v184 = vpop.f32.mrb[0].mxu0
    %185 = vmatprep.mubr.f32.mxu0 0.0
    %186 = vmatmul.mubr.f32.gmra.mrb[0].mxu0 %v82
    %v187 = vpop.f32.mrb[0].mxu0
    %v188 = vadd.f32 %v109, %v187
    %v189 = vpop.f32.mrb[0].mxu0
    %190 = vmatprep.mubr.f32.mxu0 0.0
    %191 = vmatmul.mubr.f32.gmra.mrb[0].mxu0 %v83
    %v192 = vpop.f32.mrb[0].mxu0
    %v193 = vadd.f32 %v109, %v192
    %v194 = vpop.f32.mrb[0].mxu0
    %195 = vmatprep.mubr.f32.mxu0 0.0
    %196 = vmatmul.mubr.f32.gmra.mrb[0].mxu0 %v84
    %v197 = vpop.f32.mrb[0].mxu0
    %v198 = vadd.f32 %v109, %v197
    %v199 = vpop.f32.mrb[0].mxu0
    %200 = vmatprep.mubr.f32.mxu0 0.0
    %201 = vmatmul.mubr.f32.gmra.mrb[0].mxu0 %v85
    %v202 = vpop.f32.mrb[0].mxu0
    %v203 = vadd.f32 %v109, %v202
    %v204 = vpop.f32.mrb[0].mxu0
    %205 = vmatprep.mubr.f32.mxu0 0.0
    %206 = vmatmul.mubr.f32.gmra.mrb[0].mxu0 %v86
    %v207 = vpop.f32.mrb[0].mxu0
    %v208 = vadd.f32 %v109, %v207
    %v209 = vpop.f32.mrb[0].mxu0
    %210 = vmatprep.mubr.f32.mxu0 0.0
    %211 = vmatmul.mubr.f32.gmra.mrb[0].mxu0 %v87
    %v212 = vpop.f32.mrb[0].mxu0
    %v213 = vadd.f32 %v109, %v212
    %v214 = vpop.f32.mrb[0].mxu0
    %215 = vdwg.mxu0
    %216 = vst [vmem:[#allocation3] sm:$0xff] %v178
    %217 = vst [vmem:[#allocation3 + $0x8] sm:$0xff] %v183
    %218 = vst [vmem:[#allocation3 + $0x10] sm:$0xff] %v188
    %219 = vst [vmem:[#allocation3 + $0x18] sm:$0xff] %v193
    %220 = vst [vmem:[#allocation3 + $0x20] sm:$0xff] %v198
    %221 = vst [vmem:[#allocation3 + $0x28] sm:$0xff] %v203
    %222 = vst [vmem:[#allocation3 + $0x30] sm:$0xff] %v208
    %223 = vst [vmem:[#allocation3 + $0x38] sm:$0xff] %v213
    %v224 = vld [vmem:[#allocation10] sm:$0xff]
    %v225 = vld [vmem:[#allocation10 + $0x8] sm:$0xff]
    %v226 = vld [vmem:[#allocation10 + $0x10] sm:$0xff]
    %v227 = vld [vmem:[#allocation10 + $0x18] sm:$0xff]
    %v228 = vld [vmem:[#allocation10 + $0x20] sm:$0xff]
    %v229 = vld [vmem:[#allocation10 + $0x28] sm:$0xff]
    %v230 = vld [vmem:[#allocation10 + $0x30] sm:$0xff]
    %v231 = vld [vmem:[#allocation10 + $0x38] sm:$0xff]
    %v232 = vld [vmem:[#allocation10 + $0x40] sm:$0xff]
    %v233 = vld [vmem:[#allocation10 + $0x48] sm:$0xff]
    %v234 = vld [vmem:[#allocation10 + $0x50] sm:$0xff]
    %v235 = vld [vmem:[#allocation10 + $0x58] sm:$0xff]
    %v236 = vld [vmem:[#allocation10 + $0x60] sm:$0xff]
    %v237 = vld [vmem:[#allocation10 + $0x68] sm:$0xff]
    %v238 = vld [vmem:[#allocation10 + $0x70] sm:$0xff]
    %v239 = vld [vmem:[#allocation10 + $0x78] sm:$0xff]
    %v240 = vld [vmem:[#allocation2] sm:$0xff]
    %241 = vmatprep.subr.mxu0 0.0
    %242 = vmatpush1.msra.mxu0 %v224
    %243 = vmatprep.subr.mxu0 0.0
    %244 = vmatpush1.msra.mxu0 %v225
    %245 = vmatprep.subr.mxu0 0.0
    %246 = vmatpush1.msra.mxu0 %v226
    %247 = vmatprep.subr.mxu0 0.0
    %248 = vmatpush1.msra.mxu0 %v227
    %249 = vmatprep.subr.mxu0 0.0
    %250 = vmatpush1.msra.mxu0 %v228
    %251 = vmatprep.subr.mxu0 0.0
    %252 = vmatpush1.msra.mxu0 %v229
    %253 = vmatprep.subr.mxu0 0.0
    %254 = vmatpush1.msra.mxu0 %v230
    %255 = vmatprep.subr.mxu0 0.0
    %256 = vmatpush1.msra.mxu0 %v231
    %257 = vmatprep.subr.mxu0 0.0
    %258 = vmatpush1.msra.mxu0 %v232
    %259 = vmatprep.subr.mxu0 0.0
    %260 = vmatpush1.msra.mxu0 %v233
    %261 = vmatprep.subr.mxu0 0.0
    %262 = vmatpush1.msra.mxu0 %v234
    %263 = vmatprep.subr.mxu0 0.0
    %264 = vmatpush1.msra.mxu0 %v235
    %265 = vmatprep.subr.mxu0 0.0
    %266 = vmatpush1.msra.mxu0 %v236
    %267 = vmatprep.subr.mxu0 0.0
    %268 = vmatpush1.msra.mxu0 %v237
    %269 = vmatprep.subr.mxu0 0.0
    %270 = vmatpush1.msra.mxu0 %v238
    %271 = vmatprep.subr.mxu0 0.0
    %272 = vmatpush1.msra.mxu0 %v239
    %273 = vmatprep.subr.mxu0 0.0
    %274 = vmatpush1.msra.mxu0 0.0
    %275 = vmatprep.subr.mxu0 0.0
    %276 = vmatpush1.msra.mxu0 0.0
    %277 = vmatprep.subr.mxu0 0.0
    %278 = vmatpush1.msra.mxu0 0.0
    %279 = vmatprep.subr.mxu0 0.0
    %280 = vmatpush1.msra.mxu0 0.0
    %281 = vmatprep.subr.mxu0 0.0
    %282 = vmatpush1.msra.mxu0 0.0
    %283 = vmatprep.subr.mxu0 0.0
    %284 = vmatpush1.msra.mxu0 0.0
    %285 = vmatprep.subr.mxu0 0.0
    %286 = vmatpush1.msra.mxu0 0.0
    %287 = vmatprep.subr.mxu0 0.0
    %288 = vmatpush1.msra.mxu0 0.0
    %289 = vmatprep.subr.mxu0 0.0
    %290 = vmatpush1.msra.mxu0 0.0
    %291 = vmatprep.subr.mxu0 0.0
    %292 = vmatpush1.msra.mxu0 0.0
    %293 = vmatprep.subr.mxu0 0.0
    %294 = vmatpush1.msra.mxu0 0.0
    %295 = vmatprep.subr.mxu0 0.0
    %296 = vmatpush1.msra.mxu0 0.0
    %297 = vmatprep.subr.mxu0 0.0
    %298 = vmatpush1.msra.mxu0 0.0
    %299 = vmatprep.subr.mxu0 0.0
    %300 = vmatpush1.msra.mxu0 0.0
    %301 = vmatprep.subr.mxu0 0.0
    %302 = vmatpush1.msra.mxu0 0.0
    %303 = vmatprep.subr.mxu0 0.0
    %304 = vmatpush1.msra.mxu0 0.0
    %305 = vmatprep.mubr.f32.mxu0 0.0
    %306 = vmatmul.mubr.f32.gmra.mrb[0].mxu0 %v240
    %v307 = vpop.f32.mrb[0].mxu0
    %v308 = vadd.f32 0.0, %v307
    %v309 = vpop.f32.mrb[0].mxu0
    %310 = vdwg.mxu0
    %v311 = vld [vmem:[#allocation3] sm:$0xff]
    %v312 = vadd.f32 %v311, %v308
    %v313 = vtanh.pop %v312
    %314 = vst [vmem:[#allocation12] sm:$0xff] %v313
    %315 = vmatprep.subr.mxu0 0.0
    %316 = vmatpush1.msra.mxu0 %v224
    %317 = vmatprep.subr.mxu0 0.0
    %318 = vmatpush1.msra.mxu0 %v225
    %319 = vmatprep.subr.mxu0 0.0
    %320 = vmatpush1.msra.mxu0 %v226
    %321 = vmatprep.subr.mxu0 0.0
    %322 = vmatpush1.msra.mxu0 %v227
    %323 = vmatprep.subr.mxu0 0.0
    %324 = vmatpush1.msra.mxu0 %v228
    %325 = vmatprep.subr.mxu0 0.0
    %326 = vmatpush1.msra.mxu0 %v229
    %327 = vmatprep.subr.mxu0 0.0
    %328 = vmatpush1.msra.mxu0 %v230
    %329 = vmatprep.subr.mxu0 0.0
    %330 = vmatpush1.msra.mxu0 %v231
    %331 = vmatprep.subr.mxu0 0.0
    %332 = vmatpush1.msra.mxu0 %v232
    %333 = vmatprep.subr.mxu0 0.0
    %334 = vmatpush1.msra.mxu0 %v233
    %335 = vmatprep.subr.mxu0 0.0
    %336 = vmatpush1.msra.mxu0 %v234
    %337 = vmatprep.subr.mxu0 0.0
    %338 = vmatpush1.msra.mxu0 %v235
    %339 = vmatprep.subr.mxu0 0.0
    %340 = vmatpush1.msra.mxu0 %v236
    %341 = vmatprep.subr.mxu0 0.0
    %342 = vmatpush1.msra.mxu0 %v237
    %343 = vmatprep.subr.mxu0 0.0
    %344 = vmatpush1.msra.mxu0 %v238
    %345 = vmatprep.subr.mxu0 0.0
    %346 = vmatpush1.msra.mxu0 %v239
    %347 = vmatprep.subr.mxu0 0.0
    %348 = vmatpush1.msra.mxu0 0.0
    %349 = vmatprep.subr.mxu0 0.0
    %350 = vmatpush1.msra.mxu0 0.0
    %351 = vmatprep.subr.mxu0 0.0
    %352 = vmatpush1.msra.mxu0 0.0
    %353 = vmatprep.subr.mxu0 0.0
    %354 = vmatpush1.msra.mxu0 0.0
    %355 = vmatprep.subr.mxu0 0.0
    %356 = vmatpush1.msra.mxu0 0.0
    %357 = vmatprep.subr.mxu0 0.0
    %358 = vmatpush1.msra.mxu0 0.0
    %359 = vmatprep.subr.mxu0 0.0
    %360 = vmatpush1.msra.mxu0 0.0
    %361 = vmatprep.subr.mxu0 0.0
    %362 = vmatpush1.msra.mxu0 0.0
    %363 = vmatprep.subr.mxu0 0.0
    %364 = vmatpush1.msra.mxu0 0.0
    %365 = vmatprep.subr.mxu0 0.0
    %366 = vmatpush1.msra.mxu0 0.0
    %367 = vmatprep.subr.mxu0 0.0
    %368 = vmatpush1.msra.mxu0 0.0
    %369 = vmatprep.subr.mxu0 0.0
    %370 = vmatpush1.msra.mxu0 0.0
    %371 = vmatprep.subr.mxu0 0.0
    %372 = vmatpush1.msra.mxu0 0.0
    %373 = vmatprep.subr.mxu0 0.0
    %374 = vmatpush1.msra.mxu0 0.0
    %375 = vmatprep.subr.mxu0 0.0
    %376 = vmatpush1.msra.mxu0 0.0
    %377 = vmatprep.subr.mxu0 0.0
    %378 = vmatpush1.msra.mxu0 0.0
    %379 = vmatprep.mubr.f32.mxu0 0.0
    %380 = vmatmul.mubr.f32.gmra.mrb[0].mxu0 %v313
    %v381 = vpop.f32.mrb[0].mxu0
    %v382 = vadd.f32 0.0, %v381
    %v383 = vpop.f32.mrb[0].mxu0
    %384 = vdwg.mxu0
    %s385 = scalar_lea.vmem [#allocation3], 8
    %v386 = vld [vmem:[%s385] sm:$0xff]
    %v387 = vadd.f32 %v386, %v382
    %v388 = vtanh.pop %v387
    %s389 = scalar_lea.vmem [#allocation12], 8
    %390 = vst [vmem:[%s389] sm:$0xff] %v388
    %391 = vmatprep.subr.mxu0 0.0
    %392 = vmatpush1.msra.mxu0 %v224
    %393 = vmatprep.subr.mxu0 0.0
    %394 = vmatpush1.msra.mxu0 %v225
    %395 = vmatprep.subr.mxu0 0.0
    %396 = vmatpush1.msra.mxu0 %v226
    %397 = vmatprep.subr.mxu0 0.0
    %398 = vmatpush1.msra.mxu0 %v227
    %399 = vmatprep.subr.mxu0 0.0
    %400 = vmatpush1.msra.mxu0 %v228
    %401 = vmatprep.subr.mxu0 0.0
    %402 = vmatpush1.msra.mxu0 %v229
    %403 = vmatprep.subr.mxu0 0.0
    %404 = vmatpush1.msra.mxu0 %v230
    %405 = vmatprep.subr.mxu0 0.0
    %406 = vmatpush1.msra.mxu0 %v231
    %407 = vmatprep.subr.mxu0 0.0
    %408 = vmatpush1.msra.mxu0 %v232
    %409 = vmatprep.subr.mxu0 0.0
    %410 = vmatpush1.msra.mxu0 %v233
    %411 = vmatprep.subr.mxu0 0.0
    %412 = vmatpush1.msra.mxu0 %v234
    %413 = vmatprep.subr.mxu0 0.0
    %414 = vmatpush1.msra.mxu0 %v235
    %415 = vmatprep.subr.mxu0 0.0
    %416 = vmatpush1.msra.mxu0 %v236
    %417 = vmatprep.subr.mxu0 0.0
    %418 = vmatpush1.msra.mxu0 %v237
    %419 = vmatprep.subr.mxu0 0.0
    %420 = vmatpush1.msra.mxu0 %v238
    %421 = vmatprep.subr.mxu0 0.0
    %422 = vmatpush1.msra.mxu0 %v239
    %423 = vmatprep.subr.mxu0 0.0
    %424 = vmatpush1.msra.mxu0 0.0
    %425 = vmatprep.subr.mxu0 0.0
    %426 = vmatpush1.msra.mxu0 0.0
    %427 = vmatprep.subr.mxu0 0.0
    %428 = vmatpush1.msra.mxu0 0.0
    %429 = vmatprep.subr.mxu0 0.0
    %430 = vmatpush1.msra.mxu0 0.0
    %431 = vmatprep.subr.mxu0 0.0
    %432 = vmatpush1.msra.mxu0 0.0
    %433 = vmatprep.subr.mxu0 0.0
    %434 = vmatpush1.msra.mxu0 0.0
    %435 = vmatprep.subr.mxu0 0.0
    %436 = vmatpush1.msra.mxu0 0.0
    %437 = vmatprep.subr.mxu0 0.0
    %438 = vmatpush1.msra.mxu0 0.0
    %439 = vmatprep.subr.mxu0 0.0
    %440 = vmatpush1.msra.mxu0 0.0
    %441 = vmatprep.subr.mxu0 0.0
    %442 = vmatpush1.msra.mxu0 0.0
    %443 = vmatprep.subr.mxu0 0.0
    %444 = vmatpush1.msra.mxu0 0.0
    %445 = vmatprep.subr.mxu0 0.0
    %446 = vmatpush1.msra.mxu0 0.0
    %447 = vmatprep.subr.mxu0 0.0
    %448 = vmatpush1.msra.mxu0 0.0
    %449 = vmatprep.subr.mxu0 0.0
    %450 = vmatpush1.msra.mxu0 0.0
    %451 = vmatprep.subr.mxu0 0.0
    %452 = vmatpush1.msra.mxu0 0.0
    %453 = vmatprep.subr.mxu0 0.0
    %454 = vmatpush1.msra.mxu0 0.0
    %455 = vmatprep.mubr.f32.mxu0 0.0
    %456 = vmatmul.mubr.f32.gmra.mrb[0].mxu0 %v388
    %v457 = vpop.f32.mrb[0].mxu0
    %v458 = vadd.f32 0.0, %v457
    %v459 = vpop.f32.mrb[0].mxu0
    %460 = vdwg.mxu0
    %s461 = scalar_lea.vmem [#allocation3], 16
    %v462 = vld [vmem:[%s461] sm:$0xff]
    %v463 = vadd.f32 %v462, %v458
    %v464 = vtanh.pop %v463
    %s465 = scalar_lea.vmem [#allocation12], 16
    %466 = vst [vmem:[%s465] sm:$0xff] %v464
    %467 = vmatprep.subr.mxu0 0.0
    %468 = vmatpush1.msra.mxu0 %v224
    %469 = vmatprep.subr.mxu0 0.0
    %470 = vmatpush1.msra.mxu0 %v225
    %471 = vmatprep.subr.mxu0 0.0
    %472 = vmatpush1.msra.mxu0 %v226
    %473 = vmatprep.subr.mxu0 0.0
    %474 = vmatpush1.msra.mxu0 %v227
    %475 = vmatprep.subr.mxu0 0.0
    %476 = vmatpush1.msra.mxu0 %v228
    %477 = vmatprep.subr.mxu0 0.0
    %478 = vmatpush1.msra.mxu0 %v229
    %479 = vmatprep.subr.mxu0 0.0
    %480 = vmatpush1.msra.mxu0 %v230
    %481 = vmatprep.subr.mxu0 0.0
    %482 = vmatpush1.msra.mxu0 %v231
    %483 = vmatprep.subr.mxu0 0.0
    %484 = vmatpush1.msra.mxu0 %v232
    %485 = vmatprep.subr.mxu0 0.0
    %486 = vmatpush1.msra.mxu0 %v233
    %487 = vmatprep.subr.mxu0 0.0
    %488 = vmatpush1.msra.mxu0 %v234
    %489 = vmatprep.subr.mxu0 0.0
    %490 = vmatpush1.msra.mxu0 %v235
    %491 = vmatprep.subr.mxu0 0.0
    %492 = vmatpush1.msra.mxu0 %v236
    %493 = vmatprep.subr.mxu0 0.0
    %494 = vmatpush1.msra.mxu0 %v237
    %495 = vmatprep.subr.mxu0 0.0
    %496 = vmatpush1.msra.mxu0 %v238
    %497 = vmatprep.subr.mxu0 0.0
    %498 = vmatpush1.msra.mxu0 %v239
    %499 = vmatprep.subr.mxu0 0.0
    %500 = vmatpush1.msra.mxu0 0.0
    %501 = vmatprep.subr.mxu0 0.0
    %502 = vmatpush1.msra.mxu0 0.0
    %503 = vmatprep.subr.mxu0 0.0
    %504 = vmatpush1.msra.mxu0 0.0
    %505 = vmatprep.subr.mxu0 0.0
    %506 = vmatpush1.msra.mxu0 0.0
    %507 = vmatprep.subr.mxu0 0.0
    %508 = vmatpush1.msra.mxu0 0.0
    %509 = vmatprep.subr.mxu0 0.0
    %510 = vmatpush1.msra.mxu0 0.0
    %511 = vmatprep.subr.mxu0 0.0
    %512 = vmatpush1.msra.mxu0 0.0
    %513 = vmatprep.subr.mxu0 0.0
    %514 = vmatpush1.msra.mxu0 0.0
    %515 = vmatprep.subr.mxu0 0.0
    %516 = vmatpush1.msra.mxu0 0.0
    %517 = vmatprep.subr.mxu0 0.0
    %518 = vmatpush1.msra.mxu0 0.0
    %519 = vmatprep.subr.mxu0 0.0
    %520 = vmatpush1.msra.mxu0 0.0
    %521 = vmatprep.subr.mxu0 0.0
    %522 = vmatpush1.msra.mxu0 0.0
    %523 = vmatprep.subr.mxu0 0.0
    %524 = vmatpush1.msra.mxu0 0.0
    %525 = vmatprep.subr.mxu0 0.0
    %526 = vmatpush1.msra.mxu0 0.0
    %527 = vmatprep.subr.mxu0 0.0
    %528 = vmatpush1.msra.mxu0 0.0
    %529 = vmatprep.subr.mxu0 0.0
    %530 = vmatpush1.msra.mxu0 0.0
    %531 = vmatprep.mubr.f32.mxu0 0.0
    %532 = vmatmul.mubr.f32.gmra.mrb[0].mxu0 %v464
    %v533 = vpop.f32.mrb[0].mxu0
    %v534 = vadd.f32 0.0, %v533
    %v535 = vpop.f32.mrb[0].mxu0
    %536 = vdwg.mxu0
    %s537 = scalar_lea.vmem [#allocation3], 24
    %v538 = vld [vmem:[%s537] sm:$0xff]
    %v539 = vadd.f32 %v538, %v534
    %v540 = vtanh.pop %v539
    %s541 = scalar_lea.vmem [#allocation12], 24
    %542 = vst [vmem:[%s541] sm:$0xff] %v540
    %543 = vmatprep.subr.mxu0 0.0
    %544 = vmatpush1.msra.mxu0 %v224
    %545 = vmatprep.subr.mxu0 0.0
    %546 = vmatpush1.msra.mxu0 %v225
    %547 = vmatprep.subr.mxu0 0.0
    %548 = vmatpush1.msra.mxu0 %v226
    %549 = vmatprep.subr.mxu0 0.0
    %550 = vmatpush1.msra.mxu0 %v227
    %551 = vmatprep.subr.mxu0 0.0
    %552 = vmatpush1.msra.mxu0 %v228
    %553 = vmatprep.subr.mxu0 0.0
    %554 = vmatpush1.msra.mxu0 %v229
    %555 = vmatprep.subr.mxu0 0.0
    %556 = vmatpush1.msra.mxu0 %v230
    %557 = vmatprep.subr.mxu0 0.0
    %558 = vmatpush1.msra.mxu0 %v231
    %559 = vmatprep.subr.mxu0 0.0
    %560 = vmatpush1.msra.mxu0 %v232
    %561 = vmatprep.subr.mxu0 0.0
    %562 = vmatpush1.msra.mxu0 %v233
    %563 = vmatprep.subr.mxu0 0.0
    %564 = vmatpush1.msra.mxu0 %v234
    %565 = vmatprep.subr.mxu0 0.0
    %566 = vmatpush1.msra.mxu0 %v235
    %567 = vmatprep.subr.mxu0 0.0
    %568 = vmatpush1.msra.mxu0 %v236
    %569 = vmatprep.subr.mxu0 0.0
    %570 = vmatpush1.msra.mxu0 %v237
    %571 = vmatprep.subr.mxu0 0.0
    %572 = vmatpush1.msra.mxu0 %v238
    %573 = vmatprep.subr.mxu0 0.0
    %574 = vmatpush1.msra.mxu0 %v239
    %575 = vmatprep.subr.mxu0 0.0
    %576 = vmatpush1.msra.mxu0 0.0
    %577 = vmatprep.subr.mxu0 0.0
    %578 = vmatpush1.msra.mxu0 0.0
    %579 = vmatprep.subr.mxu0 0.0
    %580 = vmatpush1.msra.mxu0 0.0
    %581 = vmatprep.subr.mxu0 0.0
    %582 = vmatpush1.msra.mxu0 0.0
    %583 = vmatprep.subr.mxu0 0.0
    %584 = vmatpush1.msra.mxu0 0.0
    %585 = vmatprep.subr.mxu0 0.0
    %586 = vmatpush1.msra.mxu0 0.0
    %587 = vmatprep.subr.mxu0 0.0
    %588 = vmatpush1.msra.mxu0 0.0
    %589 = vmatprep.subr.mxu0 0.0
    %590 = vmatpush1.msra.mxu0 0.0
    %591 = vmatprep.subr.mxu0 0.0
    %592 = vmatpush1.msra.mxu0 0.0
    %593 = vmatprep.subr.mxu0 0.0
    %594 = vmatpush1.msra.mxu0 0.0
    %595 = vmatprep.subr.mxu0 0.0
    %596 = vmatpush1.msra.mxu0 0.0
    %597 = vmatprep.subr.mxu0 0.0
    %598 = vmatpush1.msra.mxu0 0.0
    %599 = vmatprep.subr.mxu0 0.0
    %600 = vmatpush1.msra.mxu0 0.0
    %601 = vmatprep.subr.mxu0 0.0
    %602 = vmatpush1.msra.mxu0 0.0
    %603 = vmatprep.subr.mxu0 0.0
    %604 = vmatpush1.msra.mxu0 0.0
    %605 = vmatprep.subr.mxu0 0.0
    %606 = vmatpush1.msra.mxu0 0.0
    %607 = vmatprep.mubr.f32.mxu0 0.0
    %608 = vmatmul.mubr.f32.gmra.mrb[0].mxu0 %v540
    %v609 = vpop.f32.mrb[0].mxu0
    %v610 = vadd.f32 0.0, %v609
    %v611 = vpop.f32.mrb[0].mxu0
    %612 = vdwg.mxu0
    %s613 = scalar_lea.vmem [#allocation3], 32
    %v614 = vld [vmem:[%s613] sm:$0xff]
    %v615 = vadd.f32 %v614, %v610
    %v616 = vtanh.pop %v615
    %s617 = scalar_lea.vmem [#allocation12], 32
    %618 = vst [vmem:[%s617] sm:$0xff] %v616
    %619 = vmatprep.subr.mxu0 0.0
    %620 = vmatpush1.msra.mxu0 %v224
    %621 = vmatprep.subr.mxu0 0.0
    %622 = vmatpush1.msra.mxu0 %v225
    %623 = vmatprep.subr.mxu0 0.0
    %624 = vmatpush1.msra.mxu0 %v226
    %625 = vmatprep.subr.mxu0 0.0
    %626 = vmatpush1.msra.mxu0 %v227
    %627 = vmatprep.subr.mxu0 0.0
    %628 = vmatpush1.msra.mxu0 %v228
    %629 = vmatprep.subr.mxu0 0.0
    %630 = vmatpush1.msra.mxu0 %v229
    %631 = vmatprep.subr.mxu0 0.0
    %632 = vmatpush1.msra.mxu0 %v230
    %633 = vmatprep.subr.mxu0 0.0
    %634 = vmatpush1.msra.mxu0 %v231
    %635 = vmatprep.subr.mxu0 0.0
    %636 = vmatpush1.msra.mxu0 %v232
    %637 = vmatprep.subr.mxu0 0.0
    %638 = vmatpush1.msra.mxu0 %v233
    %639 = vmatprep.subr.mxu0 0.0
    %640 = vmatpush1.msra.mxu0 %v234
    %641 = vmatprep.subr.mxu0 0.0
    %642 = vmatpush1.msra.mxu0 %v235
    %643 = vmatprep.subr.mxu0 0.0
    %644 = vmatpush1.msra.mxu0 %v236
    %645 = vmatprep.subr.mxu0 0.0
    %646 = vmatpush1.msra.mxu0 %v237
    %647 = vmatprep.subr.mxu0 0.0
    %648 = vmatpush1.msra.mxu0 %v238
    %649 = vmatprep.subr.mxu0 0.0
    %650 = vmatpush1.msra.mxu0 %v239
    %651 = vmatprep.subr.mxu0 0.0
    %652 = vmatpush1.msra.mxu0 0.0
    %653 = vmatprep.subr.mxu0 0.0
    %654 = vmatpush1.msra.mxu0 0.0
    %655 = vmatprep.subr.mxu0 0.0
    %656 = vmatpush1.msra.mxu0 0.0
    %657 = vmatprep.subr.mxu0 0.0
    %658 = vmatpush1.msra.mxu0 0.0
    %659 = vmatprep.subr.mxu0 0.0
    %660 = vmatpush1.msra.mxu0 0.0
    %661 = vmatprep.subr.mxu0 0.0
    %662 = vmatpush1.msra.mxu0 0.0
    %663 = vmatprep.subr.mxu0 0.0
    %664 = vmatpush1.msra.mxu0 0.0
    %665 = vmatprep.subr.mxu0 0.0
    %666 = vmatpush1.msra.mxu0 0.0
    %667 = vmatprep.subr.mxu0 0.0
    %668 = vmatpush1.msra.mxu0 0.0
    %669 = vmatprep.subr.mxu0 0.0
    %670 = vmatpush1.msra.mxu0 0.0
    %671 = vmatprep.subr.mxu0 0.0
    %672 = vmatpush1.msra.mxu0 0.0
    %673 = vmatprep.subr.mxu0 0.0
    %674 = vmatpush1.msra.mxu0 0.0
    %675 = vmatprep.subr.mxu0 0.0
    %676 = vmatpush1.msra.mxu0 0.0
    %677 = vmatprep.subr.mxu0 0.0
    %678 = vmatpush1.msra.mxu0 0.0
    %679 = vmatprep.subr.mxu0 0.0
    %680 = vmatpush1.msra.mxu0 0.0
    %681 = vmatprep.subr.mxu0 0.0
    %682 = vmatpush1.msra.mxu0 0.0
    %683 = vmatprep.mubr.f32.mxu0 0.0
    %684 = vmatmul.mubr.f32.gmra.mrb[0].mxu0 %v616
    %v685 = vpop.f32.mrb[0].mxu0
    %v686 = vadd.f32 0.0, %v685
    %v687 = vpop.f32.mrb[0].mxu0
    %688 = vdwg.mxu0
    %s689 = scalar_lea.vmem [#allocation3], 40
    %v690 = vld [vmem:[%s689] sm:$0xff]
    %v691 = vadd.f32 %v690, %v686
    %v692 = vtanh.pop %v691
    %s693 = scalar_lea.vmem [#allocation12], 40
    %694 = vst [vmem:[%s693] sm:$0xff] %v692
    %695 = vmatprep.subr.mxu0 0.0
    %696 = vmatpush1.msra.mxu0 %v224
    %697 = vmatprep.subr.mxu0 0.0
    %698 = vmatpush1.msra.mxu0 %v225
    %699 = vmatprep.subr.mxu0 0.0
    %700 = vmatpush1.msra.mxu0 %v226
    %701 = vmatprep.subr.mxu0 0.0
    %702 = vmatpush1.msra.mxu0 %v227
    %703 = vmatprep.subr.mxu0 0.0
    %704 = vmatpush1.msra.mxu0 %v228
    %705 = vmatprep.subr.mxu0 0.0
    %706 = vmatpush1.msra.mxu0 %v229
    %707 = vmatprep.subr.mxu0 0.0
    %708 = vmatpush1.msra.mxu0 %v230
    %709 = vmatprep.subr.mxu0 0.0
    %710 = vmatpush1.msra.mxu0 %v231
    %711 = vmatprep.subr.mxu0 0.0
    %712 = vmatpush1.msra.mxu0 %v232
    %713 = vmatprep.subr.mxu0 0.0
    %714 = vmatpush1.msra.mxu0 %v233
    %715 = vmatprep.subr.mxu0 0.0
    %716 = vmatpush1.msra.mxu0 %v234
    %717 = vmatprep.subr.mxu0 0.0
    %718 = vmatpush1.msra.mxu0 %v235
    %719 = vmatprep.subr.mxu0 0.0
    %720 = vmatpush1.msra.mxu0 %v236
    %721 = vmatprep.subr.mxu0 0.0
    %722 = vmatpush1.msra.mxu0 %v237
    %723 = vmatprep.subr.mxu0 0.0
    %724 = vmatpush1.msra.mxu0 %v238
    %725 = vmatprep.subr.mxu0 0.0
    %726 = vmatpush1.msra.mxu0 %v239
    %727 = vmatprep.subr.mxu0 0.0
    %728 = vmatpush1.msra.mxu0 0.0
    %729 = vmatprep.subr.mxu0 0.0
    %730 = vmatpush1.msra.mxu0 0.0
    %731 = vmatprep.subr.mxu0 0.0
    %732 = vmatpush1.msra.mxu0 0.0
    %733 = vmatprep.subr.mxu0 0.0
    %734 = vmatpush1.msra.mxu0 0.0
    %735 = vmatprep.subr.mxu0 0.0
    %736 = vmatpush1.msra.mxu0 0.0
    %737 = vmatprep.subr.mxu0 0.0
    %738 = vmatpush1.msra.mxu0 0.0
    %739 = vmatprep.subr.mxu0 0.0
    %740 = vmatpush1.msra.mxu0 0.0
    %741 = vmatprep.subr.mxu0 0.0
    %742 = vmatpush1.msra.mxu0 0.0
    %743 = vmatprep.subr.mxu0 0.0
    %744 = vmatpush1.msra.mxu0 0.0
    %745 = vmatprep.subr.mxu0 0.0
    %746 = vmatpush1.msra.mxu0 0.0
    %747 = vmatprep.subr.mxu0 0.0
    %748 = vmatpush1.msra.mxu0 0.0
    %749 = vmatprep.subr.mxu0 0.0
    %750 = vmatpush1.msra.mxu0 0.0
    %751 = vmatprep.subr.mxu0 0.0
    %752 = vmatpush1.msra.mxu0 0.0
    %753 = vmatprep.subr.mxu0 0.0
    %754 = vmatpush1.msra.mxu0 0.0
    %755 = vmatprep.subr.mxu0 0.0
    %756 = vmatpush1.msra.mxu0 0.0
    %757 = vmatprep.subr.mxu0 0.0
    %758 = vmatpush1.msra.mxu0 0.0
    %759 = vmatprep.mubr.f32.mxu0 0.0
    %760 = vmatmul.mubr.f32.gmra.mrb[0].mxu0 %v692
    %v761 = vpop.f32.mrb[0].mxu0
    %v762 = vadd.f32 0.0, %v761
    %v763 = vpop.f32.mrb[0].mxu0
    %764 = vdwg.mxu0
    %s765 = scalar_lea.vmem [#allocation3], 48
    %v766 = vld [vmem:[%s765] sm:$0xff]
    %v767 = vadd.f32 %v766, %v762
    %v768 = vtanh.pop %v767
    %s769 = scalar_lea.vmem [#allocation12], 48
    %770 = vst [vmem:[%s769] sm:$0xff] %v768
    %771 = vmatprep.subr.mxu0 0.0
    %772 = vmatpush1.msra.mxu0 %v224
    %773 = vmatprep.subr.mxu0 0.0
    %774 = vmatpush1.msra.mxu0 %v225
    %775 = vmatprep.subr.mxu0 0.0
    %776 = vmatpush1.msra.mxu0 %v226
    %777 = vmatprep.subr.mxu0 0.0
    %778 = vmatpush1.msra.mxu0 %v227
    %779 = vmatprep.subr.mxu0 0.0
    %780 = vmatpush1.msra.mxu0 %v228
    %781 = vmatprep.subr.mxu0 0.0
    %782 = vmatpush1.msra.mxu0 %v229
    %783 = vmatprep.subr.mxu0 0.0
    %784 = vmatpush1.msra.mxu0 %v230
    %785 = vmatprep.subr.mxu0 0.0
    %786 = vmatpush1.msra.mxu0 %v231
    %787 = vmatprep.subr.mxu0 0.0
    %788 = vmatpush1.msra.mxu0 %v232
    %789 = vmatprep.subr.mxu0 0.0
    %790 = vmatpush1.msra.mxu0 %v233
    %791 = vmatprep.subr.mxu0 0.0
    %792 = vmatpush1.msra.mxu0 %v234
    %793 = vmatprep.subr.mxu0 0.0
    %794 = vmatpush1.msra.mxu0 %v235
    %795 = vmatprep.subr.mxu0 0.0
    %796 = vmatpush1.msra.mxu0 %v236
    %797 = vmatprep.subr.mxu0 0.0
    %798 = vmatpush1.msra.mxu0 %v237
    %799 = vmatprep.subr.mxu0 0.0
    %800 = vmatpush1.msra.mxu0 %v238
    %801 = vmatprep.subr.mxu0 0.0
    %802 = vmatpush1.msra.mxu0 %v239
    %803 = vmatprep.subr.mxu0 0.0
    %804 = vmatpush1.msra.mxu0 0.0
    %805 = vmatprep.subr.mxu0 0.0
    %806 = vmatpush1.msra.mxu0 0.0
    %807 = vmatprep.subr.mxu0 0.0
    %808 = vmatpush1.msra.mxu0 0.0
    %809 = vmatprep.subr.mxu0 0.0
    %810 = vmatpush1.msra.mxu0 0.0
    %811 = vmatprep.subr.mxu0 0.0
    %812 = vmatpush1.msra.mxu0 0.0
    %813 = vmatprep.subr.mxu0 0.0
    %814 = vmatpush1.msra.mxu0 0.0
    %815 = vmatprep.subr.mxu0 0.0
    %816 = vmatpush1.msra.mxu0 0.0
    %817 = vmatprep.subr.mxu0 0.0
    %818 = vmatpush1.msra.mxu0 0.0
    %819 = vmatprep.subr.mxu0 0.0
    %820 = vmatpush1.msra.mxu0 0.0
    %821 = vmatprep.subr.mxu0 0.0
    %822 = vmatpush1.msra.mxu0 0.0
    %823 = vmatprep.subr.mxu0 0.0
    %824 = vmatpush1.msra.mxu0 0.0
    %825 = vmatprep.subr.mxu0 0.0
    %826 = vmatpush1.msra.mxu0 0.0
    %827 = vmatprep.subr.mxu0 0.0
    %828 = vmatpush1.msra.mxu0 0.0
    %829 = vmatprep.subr.mxu0 0.0
    %830 = vmatpush1.msra.mxu0 0.0
    %831 = vmatprep.subr.mxu0 0.0
    %832 = vmatpush1.msra.mxu0 0.0
    %833 = vmatprep.subr.mxu0 0.0
    %834 = vmatpush1.msra.mxu0 0.0
    %835 = vmatprep.mubr.f32.mxu0 0.0
    %836 = vmatmul.mubr.f32.gmra.mrb[0].mxu0 %v768
    %v837 = vpop.f32.mrb[0].mxu0
    %v838 = vadd.f32 0.0, %v837
    %v839 = vpop.f32.mrb[0].mxu0
    %840 = vdwg.mxu0
    %s841 = scalar_lea.vmem [#allocation3], 56
    %v842 = vld [vmem:[%s841] sm:$0xff]
    %v843 = vadd.f32 %v842, %v838
    %v844 = vtanh.pop %v843
    %s845 = scalar_lea.vmem [#allocation12], 56
    %846 = vst [vmem:[%s845] sm:$0xff] %v844
    %847 = vst [vmem:[#allocation2] sm:$0xff] %v844
    // Predicated region
    $region42: #{tpu_custom_call.1} parent=1 // pred_check
      _
    $region43: #{tpu_custom_call.1} parent=1 // pred_check_branch
      %849 = sbr.rel (0) target = $region45
    $region44: #{tpu_custom_call.1} parent=1 // pred_region
      %s851 = ssub.s32 1024, 1024
      %852 = vsyncadd [#allocation6], %s851
      %s853 = sshll.u32 [#allocation12], 4
      %s854 = int_to_ptr.vmem [resolvable:$true] %s853
      %859 = dma.vmem_to_hbm [thread:$0]  %s854, 1024, %s5, [#allocation6], 128, 128, 8
    $region45: #{tpu_custom_call.1} parent=1 // pred_fallthru
      _
    // Predicated region
    $region46: #{tpu_custom_call.1} parent=1 // pred_check
      _
    $region47: #{tpu_custom_call.1} parent=1 // pred_check_branch
      %861 = sbr.rel (0) target = $region49
    $region48: #{tpu_custom_call.1} parent=1 // pred_region
      %862 = dma.done [#allocation6], 1024
    $region49: #{tpu_custom_call.1} parent=1 // pred_fallthru
      _
    %863 = vsyncpa [#allocation5], 1
    %864 = vsyncpa [#allocation8], 1
    %865 = vsyncpa [#allocation11], 1
    %866 = vsyncpa [#allocation6], 1

</llo_original>
